<compile_context>
chip_gen: v6e
topology: v6e:2x2x1
jax: 0.10.0
libtpu: 0.0.40
codegen_flags: <defaults>
</compile_context>

<pallas_src>
import functools

import jax
import jax.numpy as jnp
import numpy as np
from jax.experimental import pallas as pl
from jax.experimental.pallas import tpu as pltpu

LANE = 128


# ----------------------------- small helpers --------------------------------
def _round_up(x, m):
    return (x + m - 1) // m * m


def _sublane_unit(dtype):
    # packed sublane tile: 8 rows for 4-byte, 16 for 2-byte, 32 for 1-byte dtypes
    return {4: 8, 2: 16, 1: 32}[jnp.dtype(dtype).itemsize]


def _vmem_budget_bytes():
    """Per-generation VMEM budget (75% of capacity, capped), conservative fallback."""
    try:
        cap = getattr(pltpu.get_tpu_info(), "vmem_capacity_bytes", None)
        if cap:
            return int(min(cap * 3 // 4, 96 * 1024 * 1024))
    except Exception:
        pass
    return 48 * 1024 * 1024  # v7x-safe default


def _pick_tile(dim, target, unit):
    """Largest multiple of `unit` that divides `dim` and is <= max(target, unit)."""
    best = unit
    top = min(max(target, unit), dim)
    for t in range(unit, top + 1, unit):
        if dim % t == 0:
            best = t
    return best


def _maybe_split_parallel(dim, tile, unit):
    """Prefer >=2 blocks along a 'parallel' grid axis (v7x has 2 TensorCores)."""
    if dim // tile >= 2 or tile < 2 * unit:
        return tile
    half = (tile // 2) // unit * unit
    if half >= unit and dim % half == 0:
        return half
    return tile


def _pad_cast(x, rows, cols, dtype):
    x = x.astype(dtype)
    pr, pc = rows - x.shape[0], cols - x.shape[1]
    if pr or pc:
        x = jnp.pad(x, ((0, pr), (0, pc)))
    return x


# ---------------------------------------------------------------------------
# Fused kernel (common case: padded feature dim K fits in VMEM as one block).
# Grid = (blocks of projected operand's rows [parallel], blocks of the other
# operand's rows [arbitrary]).  The projection through W is computed once per
# outer block (inner axis == 0) into VMEM scratch and reused across the sweep.
# ---------------------------------------------------------------------------
def _fused_kernel(px_ref, w_ref, oth_ref, o_ref, proj_ref, *,
                  contract_w_axis, proj_is_lhs):
    @pl.when(pl.program_id(1) == 0)
    def _():
        proj_ref[...] = jax.lax.dot_general(
            px_ref[...], w_ref[...],
            (((1,), (contract_w_axis,)), ((), ())),
            preferred_element_type=jnp.float32,
        ).astype(proj_ref.dtype)

    if proj_is_lhs:
        lhs, rhs = proj_ref[...], oth_ref[...]
    else:
        lhs, rhs = oth_ref[...], proj_ref[...]
    # NT GEMM: contract the feature (last) axis of both operands, no transpose
    # materialized; f32 accumulation on the MXU.
    o_ref[...] = jax.lax.dot_general(
        lhs, rhs, (((1,), (1,)), ((), ())),
        preferred_element_type=jnp.float32,
    ).astype(o_ref.dtype)


def _fused_call(px, w, oth, *, contract_w_axis, proj_is_lhs, tp, to,
                out_dtype, vmem_limit):
    P, K = px.shape
    O = oth.shape[0]
    if proj_is_lhs:
        out_shape = (P, O)
        out_spec = pl.BlockSpec((tp, to), lambda p, q: (p, q))
    else:
        out_shape = (O, P)
        out_spec = pl.BlockSpec((to, tp), lambda p, q: (q, p))
    itemsize = px.dtype.itemsize
    return pl.pallas_call(
        functools.partial(_fused_kernel, contract_w_axis=contract_w_axis,
                          proj_is_lhs=proj_is_lhs),
        out_shape=jax.ShapeDtypeStruct(out_shape, out_dtype),
        grid_spec=pltpu.PrefetchScalarGridSpec(
            num_scalar_prefetch=0,
            grid=(P // tp, O // to),
            in_specs=[
                pl.BlockSpec((tp, K), lambda p, q: (p, 0)),
                pl.BlockSpec((K, K), lambda p, q: (0, 0)),   # W resident across grid
                pl.BlockSpec((to, K), lambda p, q: (q, 0)),
            ],
            out_specs=out_spec,
            scratch_shapes=[pltpu.VMEM((tp, K), px.dtype)],
        ),
        compiler_params=pltpu.CompilerParams(
            dimension_semantics=("parallel", "arbitrary"),
            vmem_limit_bytes=vmem_limit,
        ),
        cost_estimate=pl.CostEstimate(
            flops=2 * P * K * K + 2 * P * O * K,
            transcendentals=0,
            bytes_accessed=itemsize * (P * K + K * K + (P // tp) * O * K)
                           + jnp.dtype(out_dtype).itemsize * P * O,
        ),
    )(px, w, oth)


# ---------------------------------------------------------------------------
# Fallback path for very large d: k-tiled projection + k-tiled NT GEMM.
# ---------------------------------------------------------------------------
def _project_kernel(x_ref, w_ref, o_ref, acc_ref, *, contract_w_axis):
    @pl.when(pl.program_id(2) == 0)
    def _():
        acc_ref[...] = jnp.zeros_like(acc_ref)
    acc_ref[...] += jax.lax.dot_general(
        x_ref[...], w_ref[...],
        (((1,), (contract_w_axis,)), ((), ())),
        preferred_element_type=jnp.float32)

    @pl.when(pl.program_id(2) == pl.num_programs(2) - 1)
    def _():
        o_ref[...] = acc_ref[...].astype(o_ref.dtype)


def _project_call(x, w, *, contract_w_axis, tr, tc, tk, vmem_limit):
    rows, K = x.shape
    if contract_w_axis == 0:      # X @ W   : W block (tk, tc) at (kk, j)
        w_spec = pl.BlockSpec((tk, tc), lambda i, j, kk: (kk, j))
    else:                         # X @ W.T : W block (tc, tk) at (j, kk)
        w_spec = pl.BlockSpec((tc, tk), lambda i, j, kk: (j, kk))
    return pl.pallas_call(
        functools.partial(_project_kernel, contract_w_axis=contract_w_axis),
        out_shape=jax.ShapeDtypeStruct((rows, K), x.dtype),
        grid_spec=pltpu.PrefetchScalarGridSpec(
            num_scalar_prefetch=0,
            grid=(rows // tr, K // tc, K // tk),
            in_specs=[pl.BlockSpec((tr, tk), lambda i, j, kk: (i, kk)), w_spec],
            out_specs=pl.BlockSpec((tr, tc), lambda i, j, kk: (i, j)),
            scratch_shapes=[pltpu.VMEM((tr, tc), jnp.float32)],
        ),
        compiler_params=pltpu.CompilerParams(
            dimension_semantics=("parallel", "parallel", "arbitrary"),
            vmem_limit_bytes=vmem_limit,
        ),
        cost_estimate=pl.CostEstimate(
            flops=2 * rows * K * K, transcendentals=0,
            bytes_accessed=x.dtype.itemsize * (2 * rows * K + K * K)),
    )(x, w)


def _gemm_nt_kernel(a_ref, b_ref, o_ref, *, single_k):
    prod = jax.lax.dot_general(
        a_ref[...], b_ref[...], (((1,), (1,)), ((), ())),
        preferred_element_type=jnp.float32)
    if single_k:
        o_ref[...] = prod.astype(o_ref.dtype)
    else:
        # o_ref is f32 and revisits the same (i, j) block across k:
        # accumulate in place, no separate accumulator scratch / epilogue copy.
        @pl.when(pl.program_id(2) == 0)
        def _():
            o_ref[...] = jnp.zeros_like(o_ref)
        o_ref[...] += prod


def _gemm_nt_call(a, b, *, tm, tn, tk, vmem_limit):
    M, K = a.shape
    N = b.shape[0]
    nk = K // tk
    return pl.pallas_call(
        functools.partial(_gemm_nt_kernel, single_k=(nk == 1)),
        out_shape=jax.ShapeDtypeStruct((M, N), jnp.float32),
        grid_spec=pltpu.PrefetchScalarGridSpec(
            num_scalar_prefetch=0,
            grid=(M // tm, N // tn, nk),
            in_specs=[
                pl.BlockSpec((tm, tk), lambda i, j, kk: (i, kk)),
                pl.BlockSpec((tn, tk), lambda i, j, kk: (j, kk)),
            ],
            out_specs=pl.BlockSpec((tm, tn), lambda i, j, kk: (i, j)),
        ),
        compiler_params=pltpu.CompilerParams(
            dimension_semantics=("parallel", "parallel", "arbitrary"),
            vmem_limit_bytes=vmem_limit,
        ),
        cost_estimate=pl.CostEstimate(
            flops=2 * M * N * K, transcendentals=0,
            bytes_accessed=a.dtype.itemsize * (M * K + N * K) + 4 * M * N),
    )(a, b)


# ---------------------------------------------------------------------------
# Wrapper: minimal padding, per-generation tiling, path selection.
# ---------------------------------------------------------------------------
def inner_product_decoder(drug, disease, weight, *,
                          compute_dtype=jnp.bfloat16,
                          out_dtype=jnp.float32,
                          force_two_stage=False,
                          tm_target=None, tn_target=None, tk_target=None):
    """drug: [n_drug, d], disease: [n_dis, d], weight: [d, d] (torch Linear layout).

    compute_dtype=bfloat16 (default) uses the bf16-native MXU with f32 accumulation;
    pass jnp.float32 for bit-closer parity with the PyTorch f32 forward.
    """
    n_drug, d = drug.shape
    n_dis, d2 = disease.shape
    assert d == d2 == weight.shape[0] == weight.shape[1]

    cd = jnp.dtype(compute_dtype)
    sub = _sublane_unit(cd)
    # Hardware minima only (no rounding up to tile sizes):
    m_unit = max(sub, 8)      # drug rows: sublane of compute tiles and of the f32 output
    n_unit = LANE             # disease rows: lane of the output (and >= sublane pack)
    k_unit = LANE             # feature dim: lane of every compute tile
    M = _round_up(n_drug, m_unit)
    N = _round_up(n_dis, n_unit)
    K = _round_up(d, k_unit)

    R = _pad_cast(drug, M, K, cd)
    D = _pad_cast(disease, N, K, cd)
    # NOTE: W is static per model; under jit this pad/cast folds into the compiled graph once.
    W = _pad_cast(weight, K, K, cd)

    budget = _vmem_budget_bytes()
    big = budget >= 80 * 1024 * 1024          # v5e / v6e (128 MiB VMEM)
    tm_t = tm_target if tm_target is not None else (512 if big else 256)
    tn_t = tn_target if tn_target is not None else (512 if big else 256)
    tk_t = tk_target if tk_target is not None else (1024 if big else 512)
    fused_k_max = 2048 if big else 1024
    vmem_limit = budget

    # --------- fused single-kernel path (projection folded into the GEMM) -------
    if not force_two_stage and K <= fused_k_max:
        proj_is_lhs = n_drug <= n_dis
        if proj_is_lhs:     # A = R @ W (contract W axis 0); out = A @ D.T
            px, oth, cw = R, D, 0
            p_unit, o_unit, tp_t, to_t = m_unit, n_unit, tm_t, tn_t
        else:               # B = D @ W.T (contract W axis 1); out = R @ B.T
            px, oth, cw = D, R, 1
            p_unit, o_unit, tp_t, to_t = n_unit, m_unit, tn_t, tm_t
        P, O = px.shape[0], oth.shape[0]
        tp = _pick_tile(P, tp_t, p_unit)
        to = _pick_tile(O, to_t, o_unit)
        tp = _maybe_split_parallel(P, tp, p_unit)   # keep both v7x TCs busy if possible
        est = cd.itemsize * (3 * tp * K + 2 * K * K + 2 * to * K) + 2 * 4 * tp * to
        if est <= vmem_limit:
            out = _fused_call(px, W, oth, contract_w_axis=cw,
                              proj_is_lhs=proj_is_lhs, tp=tp, to=to,
                              out_dtype=out_dtype, vmem_limit=vmem_limit)
            return out[:n_drug, :n_dis]

    # --------- two-stage fallback (very large d): k-tiled project + GEMM --------
    tm = _pick_tile(M, tm_t, m_unit)
    tn = _pick_tile(N, tn_t, n_unit)
    tk = _pick_tile(K, tk_t, k_unit)
    if n_drug <= n_dis:
        a = _project_call(R, W, contract_w_axis=0, tr=tm, tc=tk, tk=tk,
                          vmem_limit=vmem_limit)                    # A = R @ W
        b = D
    else:
        a = R
        b = _project_call(D, W, contract_w_axis=1, tr=tn, tc=tk, tk=tk,
                          vmem_limit=vmem_limit)                    # B = D @ W.T
    out = _gemm_nt_call(a, b, tm=tm, tn=tn, tk=tk, vmem_limit=vmem_limit)
    out = out[:n_drug, :n_dis]
    if out.dtype != jnp.dtype(out_dtype):
        out = out.astype(out_dtype)
    return out


# ------------------------------- test helpers -------------------------------
def xavier_uniform(key, shape, dtype=jnp.float32):
    fan_in, fan_out = shape[1], shape[0]
    limit = float(np.sqrt(6.0 / (fan_in + fan_out)))
    return jax.random.uniform(key, shape, dtype, minval=-limit, maxval=limit)


def _reference(drug, disease, weight, compute_dtype):
    """Mimics the kernel's rounding (inputs + projected intermediate in compute_dtype),
    exact float64 matmuls on host."""
    cd = jnp.dtype(compute_dtype)
    to64 = lambda x: np.asarray(jnp.asarray(x).astype(cd).astype(jnp.float32),
                                dtype=np.float64)
    r, dm, w = to64(drug), to64(disease), to64(weight)
    if drug.shape[0] <= disease.shape[0]:
        a = to64((r @ w).astype(np.float32))
        return a @ dm.T
    b = to64((dm @ w.T).astype(np.float32))
    return r @ b.T


if __name__ == "__main__":
    input_dim = 32
    key = jax.random.PRNGKey(0)
    k_r, k_d, k_w = jax.random.split(key, 3)

    # nn.Linear(input_dim, input_dim, bias=False) weight, xavier_uniform init
    weight = xavier_uniform(k_w, (input_dim, input_dim))

    # Case 1: fused path, project the drug side (n_drug <= n_dis), f32 compute.
    drug1 = jax.random.normal(k_r, (16, input_dim), dtype=jnp.float32)
    dis1 = jax.random.normal(k_d, (40, input_dim), dtype=jnp.float32)
    out1 = jax.block_until_ready(
        inner_product_decoder(drug1, dis1, weight, compute_dtype=jnp.float32))
    ref1 = drug1 @ (dis1 @ weight.T).T
    np.testing.assert_allclose(np.asarray(out1), np.asarray(ref1), rtol=1e-5, atol=1e-4)

    # Case 2: fused path, project the disease side (n_drug > n_dis), bf16 compute.
    drug2 = jax.random.normal(k_d, (56, input_dim), dtype=jnp.float32)
    dis2 = jax.random.normal(k_r, (24, input_dim), dtype=jnp.float32)
    out2 = jax.block_until_ready(inner_product_decoder(drug2, dis2, weight))
    ref2 = _reference(drug2, dis2, weight, jnp.bfloat16)
    np.testing.assert_allclose(np.asarray(out2, dtype=np.float64), ref2,
                               rtol=1e-2, atol=1e-1)

    # Case 3: two-stage fallback (k-tiled projection + multi-k GEMM accumulation).
    d3 = 300
    k_r3, k_d3, k_w3 = jax.random.split(jax.random.PRNGKey(0), 3)
    weight3 = xavier_uniform(k_w3, (d3, d3))
    drug3 = jax.random.normal(k_r3, (40, d3), dtype=jnp.float32)
    dis3 = jax.random.normal(k_d3, (56, d3), dtype=jnp.float32)
    out3 = jax.block_until_ready(
        inner_product_decoder(drug3, dis3, weight3, force_two_stage=True,
                              tk_target=128))
    ref3 = _reference(drug3, dis3, weight3, jnp.bfloat16)
    np.testing.assert_allclose(np.asarray(out3, dtype=np.float64), ref3,
                               rtol=1e-2, atol=2e-1)

    print("KERNEL_OK")
</pallas_src>

<mosaic_0001>
module attributes {stable_mosaic.version = 11 : i64} {
  func.func @_fused_kernel(%arg0: i32, %arg1: i32, %arg2: memref<8x128xf32, #tpu.memory_space<vmem>>, %arg3: memref<128x128xf32, #tpu.memory_space<vmem>>, %arg4: memref<128x128xf32, #tpu.memory_space<vmem>>, %arg5: memref<8x128xf32, #tpu.memory_space<vmem>>, %arg6: memref<8x128xf32, #tpu.memory_space<vmem>>) attributes {dimension_semantics = [#tpu.dimension_semantics<parallel>, #tpu.dimension_semantics<arbitrary>], iteration_bounds = array<i64: 2, 1>, scalar_prefetch = 0 : i64, scratch_operands = 1 : i64, tpu.core_type = #tpu.core_type<tc>, window_params = [{transform_indices = @transform_0, window_bounds = array<i64: 8, 128>}, {pipeline_mode = #tpu.pipeline_mode<synchronous>, transform_indices = @transform_1, window_bounds = array<i64: 128, 128>}, {transform_indices = @transform_2, window_bounds = array<i64: 128, 128>}, {transform_indices = @transform_3, window_bounds = array<i64: 8, 128>}]} {
    %c0_i32 = arith.constant 0 : i32
    %0 = arith.cmpi eq, %arg1, %c0_i32 : i32
    %1 = arith.extui %0 : i1 to i32
    %c0_i32_0 = arith.constant 0 : i32
    %2 = arith.cmpi ne, %1, %c0_i32_0 : i32
    scf.if %2 {
      %c0_6 = arith.constant 0 : index
      %c0_7 = arith.constant 0 : index
      %7 = vector.load %arg2[%c0_6, %c0_7] : memref<8x128xf32, #tpu.memory_space<vmem>>, vector<8x128xf32>
      %c0_8 = arith.constant 0 : index
      %c0_9 = arith.constant 0 : index
      %8 = vector.load %arg3[%c0_8, %c0_9] : memref<128x128xf32, #tpu.memory_space<vmem>>, vector<128x128xf32>
      %cst_10 = arith.constant dense<0.000000e+00> : vector<8x128xf32>
      %9 = tpu.matmul %7, %8, %cst_10 {dimension_numbers = #tpu.dot_dimension_numbers<[1], [0], [0], [1], [0, 0, 1, 1], [], []>} : vector<8x128xf32>, vector<128x128xf32>, vector<8x128xf32> -> vector<8x128xf32>
      %c0_11 = arith.constant 0 : index
      %c0_12 = arith.constant 0 : index
      %10 = vector.load %arg6[%c0_11, %c0_12] : memref<8x128xf32, #tpu.memory_space<vmem>>, vector<8x128xf32>
      tpu.vector_store %arg6[%c0_11, %c0_12], %9 {strides = array<i32>} : memref<8x128xf32, #tpu.memory_space<vmem>>, vector<8x128xf32>,
    } else {
    }
    %c0 = arith.constant 0 : index
    %c0_1 = arith.constant 0 : index
    %3 = vector.load %arg6[%c0, %c0_1] : memref<8x128xf32, #tpu.memory_space<vmem>>, vector<8x128xf32>
    %c0_2 = arith.constant 0 : index
    %c0_3 = arith.constant 0 : index
    %4 = vector.load %arg4[%c0_2, %c0_3] : memref<128x128xf32, #tpu.memory_space<vmem>>, vector<128x128xf32>
    %cst = arith.constant dense<0.000000e+00> : vector<8x128xf32>
    %5 = tpu.matmul %3, %4, %cst {dimension_numbers = #tpu.dot_dimension_numbers<[1], [1], [0], [0], [0, 0, 1, 0], [], []>} : vector<8x128xf32>, vector<128x128xf32>, vector<8x128xf32> -> vector<8x128xf32>
    %c0_4 = arith.constant 0 : index
    %c0_5 = arith.constant 0 : index
    %6 = vector.load %arg5[%c0_4, %c0_5] : memref<8x128xf32, #tpu.memory_space<vmem>>, vector<8x128xf32>
    tpu.vector_store %arg5[%c0_4, %c0_5], %5 {strides = array<i32>} : memref<8x128xf32, #tpu.memory_space<vmem>>, vector<8x128xf32>,
    return
  }
  func.func @transform_0(%arg0: i32, %arg1: i32) -> (i32, i32) {
    %c0_i32 = arith.constant 0 : i32
    %c0_i32_0 = arith.constant 0 : i32
    return %arg0, %c0_i32 : i32, i32
  }
  func.func @transform_1(%arg0: i32, %arg1: i32) -> (i32, i32) {
    %c0_i32 = arith.constant 0 : i32
    %c0_i32_0 = arith.constant 0 : i32
    %c0_i32_1 = arith.constant 0 : i32
    return %c0_i32, %c0_i32_0 : i32, i32
  }
  func.func @transform_2(%arg0: i32, %arg1: i32) -> (i32, i32) {
    %c0_i32 = arith.constant 0 : i32
    %c0_i32_0 = arith.constant 0 : i32
    return %arg1, %c0_i32 : i32, i32
  }
  func.func @transform_3(%arg0: i32, %arg1: i32) -> (i32, i32) {
    %c0_i32 = arith.constant 0 : i32
    return %arg0, %arg1 : i32, i32
  }
}

</mosaic_0001>

<llo_original>
// kernel: tpu_custom_call.1
$region0: #{tpu_custom_call.1}
  #allocation0 [shape = 'u32[]', space=smem, size = 0x4, offset = 0x4, fixed_abs, tag = 'smem constant byte address 0x4 - core index']
  #allocation1 [shape = 'u32[144,128]{1,0:T(1,128)}', space=vmem, size = 0x12000, scoped, tag = 'internal scratch']
  #allocation2 [shape = 'f32[8,128]{1,0:T(8,128)}', space=vmem, size = 0x1000, scoped, tag = 'scratch operand']
  %s0 = inlined_call_operand.hbm [shape: f32[16,128], index: 0, kind: input, shape index: {}]
  %s1 = inlined_call_operand.hbm [shape: f32[128,128], index: 1, kind: input, shape index: {}]
  %s2 = inlined_call_operand.hbm [shape: f32[128,128], index: 2, kind: input, shape index: {}]
  %s3 = inlined_call_operand.hbm [shape: f32[16,128], index: 3, kind: output, shape index: {}]
  %s4 = sld [smem:[#allocation0]]
  $region61: #{tpu_custom_call.1} parent=0
    _
  %s6 = ssub.s32 1, %s4
  %s7 = scalar_select 0, %s6, %s4
  $region1: #{tpu_custom_call.1} parent=0
    #allocation3 [shape = 'u8[8192]{0}', space=vmem, size = 0x2000, scoped, tag = 'input window, operand 0']
    #allocation4 [shape = 's32[2]{0}', space=sflag, size = 0x8, scoped, tag = 'scoped memory for tpu_custom_call.1']
    #allocation5 [shape = 's32[2]{0}', space=sflag, size = 0x8, scoped, tag = 'scoped memory for tpu_custom_call.1']
    #allocation6 [shape = 'u8[65536]{0}', space=vmem, size = 0x10000, scoped, tag = 'input window, operand 1, single buffered']
    #allocation7 [shape = 's32[1]{0}', space=sflag, size = 0x4, scoped, tag = 'scoped memory for tpu_custom_call.1']
    #allocation8 [shape = 'u8[65536]{0}', space=vmem, size = 0x10000, scoped, tag = 'input window, operand 2, single buffered']
    #allocation9 [shape = 'u8[8192]{0}', space=vmem, size = 0x2000, scoped, tag = 'output window, operand 0']
    %8 = vsyncpa [#allocation4], 0
    %s9 = scalar_lea.sflag [#allocation4], 1
    %10 = vsyncpa %s9, 0
    %11 = vsyncpa [#allocation7], 0
    %12 = vsyncpa [#allocation5], 0
    %s13 = scalar_lea.sflag [#allocation5], 1
    %14 = vsyncpa %s13, 0
    loop: start=0, step=1, limit=4
    $region2: #{tpu_custom_call.1} parent=1 // loop_pre_header
      _
    $region3: #{tpu_custom_call.1} parent=1 // loop_header
      %s16 = sphi 0, %s20
      %p17 = scmp.ge.s32.totalorder %s16, 4
      %s23 = sphi 0, %s35
      %s24 = sphi 0, %s31
      %s25 = sphi 0, %s23
      %s26 = sphi 0, %s24
      %s27 = sphi 0, %s25
      %s28 = sphi 0, %s26
      %s38 = sphi 0, %s40
      %s41 = sphi 0, %s38
      %s42 = sphi 0, %s41
      %s58 = sphi 0, %s42
      %s62 = sphi 0, %s62
      %s64 = sphi 0, %s62
      %s65 = sphi 0, %s64
      %s79 = sphi 0, %s65
      %s85 = sphi 0, %s87
      %s88 = sphi 0, %s85
      %s89 = sphi 0, %s88
      %s105 = sphi 0, %s89
      %s113 = sphi 0, %s115
      %s116 = sphi 0, %s113
      %s117 = sphi 0, %s116
      %s133 = sphi 0, %s117
    $region4: #{tpu_custom_call.1} parent=1 // loop_header_branch
      %19 = sbr.rel (%p17) target = $region8
    $region5: #{tpu_custom_call.1} parent=1 // loop_body
      %s21 = ssub.s32 %s16, 1
      %s22 = ssub.s32 %s16, 2
      %s29 = sadd.s32 1, %s24
      %p30 = scmp.ge.s32.totalorder %s29, 1
      %s31 = scalar_select %p30, 0, %s29
      %s32 = sadd.s32 1, %s23
      %s33 = scalar_select %p30, %s32, %s23
      %p34 = scmp.ge.s32.totalorder %s33, 2
      %s35 = scalar_select %p34, 0, %s33
      %s36 = ssub.s32 %s23, %s35
      %p37 = scmp.eq.s32.totalorder %s36, 0
      %s39 = sadd.s32 %s38, 1
      %s40 = scalar_select %p37, %s38, %s39
      %p43 = pneg %p37
      %p44 = scmp.eq.s32.totalorder %s16, 1
      %p45 = por %p43, %p44
      %p46 = scmp.ne.s32.totalorder %s38, %s41
      %p47 = scmp.eq.s32.totalorder %s16, 0
      %p48 = por %p46, %p47
      %p49 = scmp.ne.s32.totalorder %s38, %s41
      %p50 = scmp.eq.s32.totalorder %s21, 1
      %p51 = por %p49, %p50
      %p52 = scmp.ne.s32.totalorder %s41, %s42
      %p53 = scmp.eq.s32.totalorder %s21, 0
      %p54 = por %p52, %p53
      %p55 = scmp.ne.s32.totalorder %s41, %s42
      %p56 = scmp.eq.s32.totalorder %s22, 1
      %p57 = por %p55, %p56
      %p59 = scmp.ne.s32.totalorder %s42, %s58
      %p60 = scmp.eq.s32.totalorder %s22, 0
      %p61 = por %p59, %p60
      %s63 = sadd.s32 %s62, 1
      %p66 = scmp.eq.s32.totalorder %s16, 1
      %p67 = scmp.ne.s32.totalorder %s62, %s64
      %p68 = scmp.eq.s32.totalorder %s16, 0
      %p69 = por %p67, %p68
      %p70 = scmp.ne.s32.totalorder %s62, %s64
      %p71 = scmp.eq.s32.totalorder %s21, 1
      %p72 = por %p70, %p71
      %p73 = scmp.ne.s32.totalorder %s64, %s65
      %p74 = scmp.eq.s32.totalorder %s21, 0
      %p75 = por %p73, %p74
      %p76 = scmp.ne.s32.totalorder %s64, %s65
      %p77 = scmp.eq.s32.totalorder %s22, 1
      %p78 = por %p76, %p77
      %p80 = scmp.ne.s32.totalorder %s65, %s79
      %p81 = scmp.eq.s32.totalorder %s22, 0
      %p82 = por %p80, %p81
      %s83 = ssub.s32 %s24, %s31
      %p84 = scmp.eq.s32.totalorder %s83, 0
      %s86 = sadd.s32 %s85, 1
      %s87 = scalar_select %p84, %s85, %s86
      %p90 = pneg %p84
      %p91 = scmp.eq.s32.totalorder %s16, 1
      %p92 = por %p90, %p91
      %p93 = scmp.ne.s32.totalorder %s85, %s88
      %p94 = scmp.eq.s32.totalorder %s16, 0
      %p95 = por %p93, %p94
      %p96 = scmp.ne.s32.totalorder %s85, %s88
      %p97 = scmp.eq.s32.totalorder %s21, 1
      %p98 = por %p96, %p97
      %p99 = scmp.ne.s32.totalorder %s88, %s89
      %p100 = scmp.eq.s32.totalorder %s21, 0
      %p101 = por %p99, %p100
      %p102 = scmp.ne.s32.totalorder %s88, %s89
      %p103 = scmp.eq.s32.totalorder %s22, 1
      %p104 = por %p102, %p103
      %p106 = scmp.ne.s32.totalorder %s89, %s105
      %p107 = scmp.eq.s32.totalorder %s22, 0
      %p108 = por %p106, %p107
      %s109 = ssub.s32 %s23, %s35
      %s110 = ssub.s32 %s24, %s31
      %s111 = sor.u32 %s109, %s110
      %p112 = scmp.eq.s32.totalorder %s111, 0
      %s114 = sadd.s32 %s113, 1
      %s115 = scalar_select %p112, %s113, %s114
      %p118 = pneg %p112
      %p119 = scmp.eq.s32.totalorder %s16, 1
      %p120 = por %p118, %p119
      %p121 = scmp.ne.s32.totalorder %s113, %s116
      %p122 = scmp.eq.s32.totalorder %s16, 0
      %p123 = por %p121, %p122
      %p124 = scmp.ne.s32.totalorder %s113, %s116
      %p125 = scmp.eq.s32.totalorder %s21, 1
      %p126 = por %p124, %p125
      %p127 = scmp.ne.s32.totalorder %s116, %s117
      %p128 = scmp.eq.s32.totalorder %s21, 0
      %p129 = por %p127, %p128
      %p130 = scmp.ne.s32.totalorder %s116, %s117
      %p131 = scmp.eq.s32.totalorder %s22, 1
      %p132 = por %p130, %p131
      %p134 = scmp.ne.s32.totalorder %s117, %s133
      %p135 = scmp.eq.s32.totalorder %s22, 0
      %p136 = por %p134, %p135
      %p137 = scmp.le.s32.totalorder 1, %s16
      %p138 = scmp.lt.s32.totalorder %s16, 3
      %p139 = pnand %p137, %p138
      %p140 = pneg %p139
      // Predicated region
      $region9: #{tpu_custom_call.1} parent=5 // pred_check
        _
      $region10: #{tpu_custom_call.1} parent=5 // pred_check_branch
        %142 = sbr.rel (%p139) target = $region12
      $region11: #{tpu_custom_call.1} parent=5 // pred_region
        %s143 = ssub.s32 %s16, 1
        // Predicated region
        $region13: #{tpu_custom_call.1} parent=11 // pred_check
          %p144 = pneg %p75
        $region14: #{tpu_custom_call.1} parent=11 // pred_check_branch
          %146 = sbr.rel (%p144) target = $region16
        $region15: #{tpu_custom_call.1} parent=11 // pred_region
          %s148 = ssub.s32 2048, 2048
          %149 = vsyncadd [#allocation7], %s148
          %s150 = sshll.u32 [#allocation6], 4
          %s151 = int_to_ptr.vmem [resolvable:$true] %s150
          %156 = dma.hbm_to_vmem [thread:$0]  %s1, 2048, %s151, [#allocation7], 128, 128, 8
        $region16: #{tpu_custom_call.1} parent=11 // pred_fallthru
          _
        // Predicated region
        $region17: #{tpu_custom_call.1} parent=11 // pred_check
          %p157 = pneg %p101
        $region18: #{tpu_custom_call.1} parent=11 // pred_check_branch
          %159 = sbr.rel (%p157) target = $region20
        $region19: #{tpu_custom_call.1} parent=11 // pred_region
          %s160 = smul.u32 16, %s26
          %s162 = ssub.s32 2048, 2048
          %163 = vsyncadd [#allocation7], %s162
          %s164 = smul.addr %s160, 128
          %s165 = scalar_lea.hbm %s2, %s164
          %s166 = sshll.u32 [#allocation8], 4
          %s167 = int_to_ptr.vmem [resolvable:$true] %s166
          %172 = dma.hbm_to_vmem [thread:$0]  %s165, 2048, %s167, [#allocation7], 128, 128, 8
        $region20: #{tpu_custom_call.1} parent=11 // pred_fallthru
          _
      $region12: #{tpu_custom_call.1} parent=5 // pred_fallthru
        _
      %p173 = scmp.lt.s32.totalorder %s16, 2
      // Predicated region
      $region21: #{tpu_custom_call.1} parent=5 // pred_check
        %p174 = pneg %p173
      $region22: #{tpu_custom_call.1} parent=5 // pred_check_branch
        %176 = sbr.rel (%p174) target = $region24
      $region23: #{tpu_custom_call.1} parent=5 // pred_region
        // Predicated region
        $region25: #{tpu_custom_call.1} parent=23 // pred_check
          %p177 = pneg %p48
        $region26: #{tpu_custom_call.1} parent=23 // pred_check_branch
          %179 = sbr.rel (%p177) target = $region28
        $region27: #{tpu_custom_call.1} parent=23 // pred_region
          %s180 = sand.u32 %s38, 1
          %s181 = scalar_lea.sflag [#allocation4], %s180
          %s182 = sand.u32 %s38, 1
          %s183 = smul.addr %s182, 8
          %s184 = scalar_lea.vmem [#allocation3], %s183
          %s186 = ssub.s32 128, 128
          %187 = vsyncadd %s181, %s186
          %s188 = smul.addr %s23, 128
          %s189 = scalar_lea.hbm %s0, %s188
          %s191 = sshll.u32 %s184, 4
          %s192 = int_to_ptr.vmem [resolvable:$true] %s191
          %194 = dma.hbm_to_vmem [thread:$0]  %s189, 128, %s192, %s181
        $region28: #{tpu_custom_call.1} parent=23 // pred_fallthru
          _
      $region24: #{tpu_custom_call.1} parent=5 // pred_fallthru
        _
      %p195 = scmp.le.s32.totalorder 1, %s16
      %p196 = scmp.lt.s32.totalorder %s16, 3
      %p197 = pnand %p195, %p196
      %p198 = pneg %p197
      // Predicated region
      $region29: #{tpu_custom_call.1} parent=5 // pred_check
        _
      $region30: #{tpu_custom_call.1} parent=5 // pred_check_branch
        %200 = sbr.rel (%p197) target = $region32
      $region31: #{tpu_custom_call.1} parent=5 // pred_region
        %s201 = ssub.s32 %s16, 1
        %s202 = sand.u32 %s41, 1
        %s203 = scalar_lea.sflag [#allocation4], %s202
        %s204 = sand.u32 %s41, 1
        %s205 = smul.addr %s204, 8
        %s206 = scalar_lea.vmem [#allocation3], %s205
        // Predicated region
        $region33: #{tpu_custom_call.1} parent=31 // pred_check
          %p207 = pneg %p54
        $region34: #{tpu_custom_call.1} parent=31 // pred_check_branch
          %209 = sbr.rel (%p207) target = $region36
        $region35: #{tpu_custom_call.1} parent=31 // pred_region
          %210 = dma.done %s203, 128
        $region36: #{tpu_custom_call.1} parent=31 // pred_fallthru
          _
        // Predicated region
        $region37: #{tpu_custom_call.1} parent=31 // pred_check
          %p211 = pneg %p75
        $region38: #{tpu_custom_call.1} parent=31 // pred_check_branch
          %213 = sbr.rel (%p211) target = $region40
        $region39: #{tpu_custom_call.1} parent=31 // pred_region
          %214 = dma.done [#allocation7], 2048
        $region40: #{tpu_custom_call.1} parent=31 // pred_fallthru
          _
        // Predicated region
        $region41: #{tpu_custom_call.1} parent=31 // pred_check
          %p215 = pneg %p101
        $region42: #{tpu_custom_call.1} parent=31 // pred_check_branch
          %217 = sbr.rel (%p215) target = $region44
        $region43: #{tpu_custom_call.1} parent=31 // pred_region
          %218 = dma.done [#allocation7], 2048
        $region44: #{tpu_custom_call.1} parent=31 // pred_fallthru
          _
        %s219 = sand.u32 %s41, 1
        %s220 = scalar_lea.sflag [#allocation4], %s219
        %s221 = sand.u32 %s41, 1
        %s222 = smul.addr %s221, 8
        %s223 = scalar_lea.vmem [#allocation3], %s222
        %p224 = pneg %p54
        %p225 = pneg %p51
        %p226 = pneg %p75
        %p227 = pneg %p72
        %p228 = pneg %p101
        %p229 = pneg %p98
        %p230 = pneg %p129
        %p231 = pneg %p126
        %s232 = sand.u32 %s116, 1
        %s233 = scalar_lea.sflag [#allocation5], %s232
        %s234 = sand.u32 %s116, 1
        %s235 = smul.addr %s234, 8
        %s236 = scalar_lea.vmem [#allocation9], %s235
        %s237 = smul.u32 16, %s26
        %p238 = scmp.eq.s32.totalorder %s26, 0
        // Predicated region
        $region45: #{tpu_custom_call.1} parent=31 // pred_check
          %p239 = pneg %p238
        $region46: #{tpu_custom_call.1} parent=31 // pred_check_branch
          %241 = sbr.rel (%p239) target = $region48
        $region47: #{tpu_custom_call.1} parent=31 // pred_region
          %v242 = vld [vmem:[%s206] sm:$0xff]
          %v243 = vld [vmem:[#allocation6] sm:$0xff]
          %v244 = vld [vmem:[#allocation6 + $0x8] sm:$0xff]
          %v245 = vld [vmem:[#allocation6 + $0x10] sm:$0xff]
          %v246 = vld [vmem:[#allocation6 + $0x18] sm:$0xff]
          %v247 = vld [vmem:[#allocation6 + $0x20] sm:$0xff]
          %v248 = vld [vmem:[#allocation6 + $0x28] sm:$0xff]
          %v249 = vld [vmem:[#allocation6 + $0x30] sm:$0xff]
          %v250 = vld [vmem:[#allocation6 + $0x38] sm:$0xff]
          %v251 = vld [vmem:[#allocation6 + $0x40] sm:$0xff]
          %v252 = vld [vmem:[#allocation6 + $0x48] sm:$0xff]
          %v253 = vld [vmem:[#allocation6 + $0x50] sm:$0xff]
          %v254 = vld [vmem:[#allocation6 + $0x58] sm:$0xff]
          %v255 = vld [vmem:[#allocation6 + $0x60] sm:$0xff]
          %v256 = vld [vmem:[#allocation6 + $0x68] sm:$0xff]
          %v257 = vld [vmem:[#allocation6 + $0x70] sm:$0xff]
          %v258 = vld [vmem:[#allocation6 + $0x78] sm:$0xff]
          %259 = vmatprep.subr.mxu0 0.0
          %260 = vmatpush1.msra.mxu0 %v258
          %261 = vmatprep.subr.mxu0 0.0
          %262 = vmatpush1.msra.mxu0 %v257
          %263 = vmatprep.subr.mxu0 0.0
          %264 = vmatpush1.msra.mxu0 %v256
          %265 = vmatprep.subr.mxu0 0.0
          %266 = vmatpush1.msra.mxu0 %v255
          %267 = vmatprep.subr.mxu0 0.0
          %268 = vmatpush1.msra.mxu0 %v254
          %269 = vmatprep.subr.mxu0 0.0
          %270 = vmatpush1.msra.mxu0 %v253
          %271 = vmatprep.subr.mxu0 0.0
          %272 = vmatpush1.msra.mxu0 %v252
          %273 = vmatprep.subr.mxu0 0.0
          %274 = vmatpush1.msra.mxu0 %v251
          %275 = vmatprep.subr.mxu0 0.0
          %276 = vmatpush1.msra.mxu0 %v250
          %277 = vmatprep.subr.mxu0 0.0
          %278 = vmatpush1.msra.mxu0 %v249
          %279 = vmatprep.subr.mxu0 0.0
          %280 = vmatpush1.msra.mxu0 %v248
          %281 = vmatprep.subr.mxu0 0.0
          %282 = vmatpush1.msra.mxu0 %v247
          %283 = vmatprep.subr.mxu0 0.0
          %284 = vmatpush1.msra.mxu0 %v246
          %285 = vmatprep.subr.mxu0 0.0
          %286 = vmatpush1.msra.mxu0 %v245
          %287 = vmatprep.subr.mxu0 0.0
          %288 = vmatpush1.msra.mxu0 %v244
          %289 = vmatprep.subr.mxu0 0.0
          %290 = vmatpush1.msra.mxu0 %v243
          %291 = vmatprep.subr.mxu0 0.0
          %292 = vmatpush2.msra.mxu0 0.0
          %293 = vmatprep.subr.mxu0 0.0
          %294 = vmatpush2.msra.mxu0 0.0
          %295 = vmatprep.subr.mxu0 0.0
          %296 = vmatpush2.msra.mxu0 0.0
          %297 = vmatprep.subr.mxu0 0.0
          %298 = vmatpush2.msra.mxu0 0.0
          %299 = vmatprep.subr.mxu0 0.0
          %300 = vmatpush2.msra.mxu0 0.0
          %301 = vmatprep.subr.mxu0 0.0
          %302 = vmatpush2.msra.mxu0 0.0
          %303 = vmatprep.subr.mxu0 0.0
          %304 = vmatpush2.msra.mxu0 0.0
          %305 = vmatprep.subr.mxu0 0.0
          %306 = vmatpush2.msra.mxu0 0.0
          %307 = vmatprep.subr.mxu0 0.0
          %308 = vmatpush2.msra.mxu0 0.0
          %309 = vmatprep.subr.mxu0 0.0
          %310 = vmatpush2.msra.mxu0 0.0
          %311 = vmatprep.subr.mxu0 0.0
          %312 = vmatpush2.msra.mxu0 0.0
          %313 = vmatprep.subr.mxu0 0.0
          %314 = vmatpush2.msra.mxu0 0.0
          %315 = vmatprep.subr.mxu0 0.0
          %316 = vmatpush2.msra.mxu0 0.0
          %317 = vmatprep.subr.mxu0 0.0
          %318 = vmatpush2.msra.mxu0 0.0
          %319 = vmatprep.subr.mxu0 0.0
          %320 = vmatpush2.msra.mxu0 0.0
          %321 = vmatprep.subr.mxu0 0.0
          %322 = vmatpush2.msra.mxu0 0.0
          %323 = vmatprep.mubr.f32.mxu0 0.0
          %324 = vmatmul.mubr.f32.gmra.mxu0 %v242
          %v325 = vpop.f32.mrf.mxu0
          %v326 = vadd.f32 0.0, %v325
          %v327 = vpop.f32.mrf.mxu0
          %328 = vdwg.mxu0
          %329 = vst [vmem:[#allocation2] sm:$0xff] %v326
        $region48: #{tpu_custom_call.1} parent=31 // pred_fallthru
          _
        %v330 = vld [vmem:[#allocation2] sm:$0xff]
        %v331 = vld [vmem:[#allocation8] sm:$0xff]
        %v332 = vld [vmem:[#allocation8 + $0x8] sm:$0xff]
        %v333 = vld [vmem:[#allocation8 + $0x10] sm:$0xff]
        %v334 = vld [vmem:[#allocation8 + $0x18] sm:$0xff]
        %v335 = vld [vmem:[#allocation8 + $0x20] sm:$0xff]
        %v336 = vld [vmem:[#allocation8 + $0x28] sm:$0xff]
        %v337 = vld [vmem:[#allocation8 + $0x30] sm:$0xff]
        %v338 = vld [vmem:[#allocation8 + $0x38] sm:$0xff]
        %v339 = vld [vmem:[#allocation8 + $0x40] sm:$0xff]
        %v340 = vld [vmem:[#allocation8 + $0x48] sm:$0xff]
        %v341 = vld [vmem:[#allocation8 + $0x50] sm:$0xff]
        %v342 = vld [vmem:[#allocation8 + $0x58] sm:$0xff]
        %v343 = vld [vmem:[#allocation8 + $0x60] sm:$0xff]
        %v344 = vld [vmem:[#allocation8 + $0x68] sm:$0xff]
        %v345 = vld [vmem:[#allocation8 + $0x70] sm:$0xff]
        %v346 = vld [vmem:[#allocation8 + $0x78] sm:$0xff]
        %347 = vmatprep.subr.mxu0 0.0
        %348 = vmatpush1.xpose.msra.mxu0 %v346
        %349 = vmatprep.subr.mxu0 0.0
        %350 = vmatpush1.xpose.msra.mxu0 %v345
        %351 = vmatprep.subr.mxu0 0.0
        %352 = vmatpush1.xpose.msra.mxu0 %v344
        %353 = vmatprep.subr.mxu0 0.0
        %354 = vmatpush1.xpose.msra.mxu0 %v343
        %355 = vmatprep.subr.mxu0 0.0
        %356 = vmatpush1.xpose.msra.mxu0 %v342
        %357 = vmatprep.subr.mxu0 0.0
        %358 = vmatpush1.xpose.msra.mxu0 %v341
        %359 = vmatprep.subr.mxu0 0.0
        %360 = vmatpush1.xpose.msra.mxu0 %v340
        %361 = vmatprep.subr.mxu0 0.0
        %362 = vmatpush1.xpose.msra.mxu0 %v339
        %363 = vmatprep.subr.mxu0 0.0
        %364 = vmatpush1.xpose.msra.mxu0 %v338
        %365 = vmatprep.subr.mxu0 0.0
        %366 = vmatpush1.xpose.msra.mxu0 %v337
        %367 = vmatprep.subr.mxu0 0.0
        %368 = vmatpush1.xpose.msra.mxu0 %v336
        %369 = vmatprep.subr.mxu0 0.0
        %370 = vmatpush1.xpose.msra.mxu0 %v335
        %371 = vmatprep.subr.mxu0 0.0
        %372 = vmatpush1.xpose.msra.mxu0 %v334
        %373 = vmatprep.subr.mxu0 0.0
        %374 = vmatpush1.xpose.msra.mxu0 %v333
        %375 = vmatprep.subr.mxu0 0.0
        %376 = vmatpush1.xpose.msra.mxu0 %v332
        %377 = vmatprep.subr.mxu0 0.0
        %378 = vmatpush1.xpose.msra.mxu0 %v331
        %379 = vmatprep.subr.mxu0 0.0
        %380 = vmatpush2.xpose.msra.mxu0 0.0
        %381 = vmatprep.subr.mxu0 0.0
        %382 = vmatpush2.xpose.msra.mxu0 0.0
        %383 = vmatprep.subr.mxu0 0.0
        %384 = vmatpush2.xpose.msra.mxu0 0.0
        %385 = vmatprep.subr.mxu0 0.0
        %386 = vmatpush2.xpose.msra.mxu0 0.0
        %387 = vmatprep.subr.mxu0 0.0
        %388 = vmatpush2.xpose.msra.mxu0 0.0
        %389 = vmatprep.subr.mxu0 0.0
        %390 = vmatpush2.xpose.msra.mxu0 0.0
        %391 = vmatprep.subr.mxu0 0.0
        %392 = vmatpush2.xpose.msra.mxu0 0.0
        %393 = vmatprep.subr.mxu0 0.0
        %394 = vmatpush2.xpose.msra.mxu0 0.0
        %395 = vmatprep.subr.mxu0 0.0
        %396 = vmatpush2.xpose.msra.mxu0 0.0
        %397 = vmatprep.subr.mxu0 0.0
        %398 = vmatpush2.xpose.msra.mxu0 0.0
        %399 = vmatprep.subr.mxu0 0.0
        %400 = vmatpush2.xpose.msra.mxu0 0.0
        %401 = vmatprep.subr.mxu0 0.0
        %402 = vmatpush2.xpose.msra.mxu0 0.0
        %403 = vmatprep.subr.mxu0 0.0
        %404 = vmatpush2.xpose.msra.mxu0 0.0
        %405 = vmatprep.subr.mxu0 0.0
        %406 = vmatpush2.xpose.msra.mxu0 0.0
        %407 = vmatprep.subr.mxu0 0.0
        %408 = vmatpush2.xpose.msra.mxu0 0.0
        %409 = vmatprep.subr.mxu0 0.0
        %410 = vmatpush2.xpose.msra.mxu0 0.0
        %411 = vmatprep.mubr.f32.mxu0 0.0
        %412 = vmatmul.mubr.f32.gmra.mxu0 %v330
        %v413 = vpop.f32.mrf.mxu0
        %v414 = vadd.f32 0.0, %v413
        %v415 = vpop.f32.mrf.mxu0
        %416 = vdwg.mxu0
        %417 = vst [vmem:[%s236] sm:$0xff] %v414
        %s418 = sand.u32 %s116, 1
        %s419 = scalar_lea.sflag [#allocation5], %s418
        %s420 = sand.u32 %s116, 1
        %s421 = smul.addr %s420, 8
        %s422 = scalar_lea.vmem [#allocation9], %s421
        // Predicated region
        $region49: #{tpu_custom_call.1} parent=31 // pred_check
          %p423 = pneg %p126
        $region50: #{tpu_custom_call.1} parent=31 // pred_check_branch
          %425 = sbr.rel (%p423) target = $region52
        $region51: #{tpu_custom_call.1} parent=31 // pred_region
          %s427 = ssub.s32 128, 128
          %428 = vsyncadd %s419, %s427
          %s429 = sadd.s32 %s26, %s25
          %s430 = smul.addr %s429, 128
          %s431 = scalar_lea.hbm %s3, %s430
          %s433 = sshll.u32 %s422, 4
          %s434 = int_to_ptr.vmem [resolvable:$true] %s433
          %436 = dma.vmem_to_hbm [thread:$0]  %s434, 128, %s431, %s419
        $region52: #{tpu_custom_call.1} parent=31 // pred_fallthru
          _
      $region32: #{tpu_custom_call.1} parent=5 // pred_fallthru
        _
      %p437 = scmp.le.s32.totalorder 2, %s16
      // Predicated region
      $region53: #{tpu_custom_call.1} parent=5 // pred_check
        %p438 = pneg %p437
      $region54: #{tpu_custom_call.1} parent=5 // pred_check_branch
        %440 = sbr.rel (%p438) target = $region56
      $region55: #{tpu_custom_call.1} parent=5 // pred_region
        %s441 = ssub.s32 %s16, 2
        // Predicated region
        $region57: #{tpu_custom_call.1} parent=55 // pred_check
          %p442 = pneg %p132
        $region58: #{tpu_custom_call.1} parent=55 // pred_check_branch
          %444 = sbr.rel (%p442) target = $region60
        $region59: #{tpu_custom_call.1} parent=55 // pred_region
          %s445 = sand.u32 %s117, 1
          %s446 = scalar_lea.sflag [#allocation5], %s445
          %s447 = sand.u32 %s117, 1
          %s448 = smul.addr %s447, 8
          %s449 = scalar_lea.vmem [#allocation9], %s448
          %450 = dma.done %s446, 128
        $region60: #{tpu_custom_call.1} parent=55 // pred_fallthru
          _
      $region56: #{tpu_custom_call.1} parent=5 // pred_fallthru
        _
    $region6: #{tpu_custom_call.1} parent=1 // loop_footer
      %s20 = sadd.s32 1, %s16
    $region7: #{tpu_custom_call.1} parent=1 // loop_footer_branch
      %15 = sbr.rel target = $region3
    $region8: #{tpu_custom_call.1} parent=1 // loop_exit
      _
    %451 = vsyncpa [#allocation4], 1
    %s452 = scalar_lea.sflag [#allocation4], 1
    %453 = vsyncpa %s452, 1
    %454 = vsyncpa [#allocation7], 1
    %455 = vsyncpa [#allocation5], 1
    %s456 = scalar_lea.sflag [#allocation5], 1
    %457 = vsyncpa %s456, 1

</llo_original>
